<compile_context>
chip_gen: v6e
topology: v6e:2x2x1
jax: 0.10.0
libtpu: 0.0.40
codegen_flags: <defaults>
</compile_context>

<pallas_src>
import functools

import jax
import jax.numpy as jnp
from jax.experimental import pallas as pl
from jax.experimental.pallas import tpu as pltpu

EPS = 1e-5  # nn.BatchNorm1d default eps
H1, H2, H3 = 256, 128, 64  # hidden sizes


def option_pricer_kernel(
    x_ref,
    w1_ref, b1_ref,
    w2_ref, b2_ref,
    w3_ref, b3_ref,
    w4_ref, b4_ref,
    out_ref,
):
    """Three (dot + f32 bias + ReLU) layers, then a VPU/XLU scalar head.

    BatchNorm is pre-folded into layers 1-2; Dropout is identity (inference).
    """
    cdt = w2_ref.dtype  # compute dtype for hidden-layer MXU operands

    # ---- Linear(F, 256) [BN folded] + ReLU (+ Dropout: identity) ----
    # f32 operands: K = F is tiny, and it avoids bf16-rounding raw features.
    h = jnp.dot(x_ref[...], w1_ref[...], preferred_element_type=jnp.float32)
    h = jnp.maximum(h + b1_ref[...], 0.0).astype(cdt)

    # ---- Linear(256, 128) [BN folded] + ReLU (+ Dropout: identity) ----
    h = jnp.dot(h, w2_ref[...], preferred_element_type=jnp.float32)
    h = jnp.maximum(h + b2_ref[...], 0.0).astype(cdt)

    # ---- Linear(128, 64) + ReLU ----
    h = jnp.dot(h, w3_ref[...], preferred_element_type=jnp.float32)
    h = jnp.maximum(h + b3_ref[...], 0.0)  # stays f32 for the head

    # ---- Linear(64, 1): elementwise multiply + lane reduction (no MXU) ----
    out_ref[...] = (
        jnp.sum(h * w4_ref[...], axis=-1, keepdims=True) + b4_ref[...]
    )


@functools.partial(jax.jit, static_argnames=("tile_b", "use_bf16"))
def option_pricer_forward(x, params, *, tile_b=2048, use_bf16=True):
    """x: (B, F) float32.  Returns (B, 1) float32."""
    B, F = x.shape
    f32 = jnp.float32
    cdt = jnp.bfloat16 if use_bf16 else f32

    (w1, b1, g1, bt1, m1, v1,
     w2, b2, g2, bt2, m2, v2,
     w3, b3, w4, b4) = params

    # ---- Fold BatchNorm (inference affine) + bias into the Linear params ----
    s1 = g1 * jax.lax.rsqrt(v1 + EPS)                  # (1, 256)
    w1f = w1 * s1                                      # stays f32 (raw features)
    b1f = (b1 - m1) * s1 + bt1
    s2 = g2 * jax.lax.rsqrt(v2 + EPS)                  # (1, 128)
    w2c = (w2 * s2).astype(cdt)
    b2f = (b2 - m2) * s2 + bt2

    w3c = w3.astype(cdt)
    w4r = w4.reshape(1, H3).astype(f32)                # (1, 64) row for VPU head
    b4r = b4.reshape(1, 1).astype(f32)                 # scalar bias

    # ---- Batch tiling: multiple of 8 sublanes; grid_b >= 2 when possible ----
    half = (((B + 1) // 2) + 7) // 8 * 8               # ceil(B/2) rounded to 8
    tb = max(8, min(tile_b, half))
    tb = ((tb + 7) // 8) * 8
    grid_b = pl.cdiv(B, tb)
    B_pad = grid_b * tb
    x_p = jnp.pad(x, ((0, B_pad - B), (0, 0))) if B_pad != B else x

    def param_spec(arr):
        # Whole (small) parameter array, constant index_map -> single buffer.
        return pl.BlockSpec(arr.shape, lambda i: (0, 0),
                            pipeline_mode=pl.Buffered(1))

    param_arrays = (w1f, b1f, w2c, b2f, w3c, b3, w4r, b4r)
    in_specs = [pl.BlockSpec((tb, F), lambda i: (i, 0))] + [
        param_spec(p) for p in param_arrays
    ]
    out_spec = pl.BlockSpec((tb, 1), lambda i: (i, 0))  # compact (B, 1) output

    out = pl.pallas_call(
        option_pricer_kernel,
        out_shape=jax.ShapeDtypeStruct((B_pad, 1), f32),
        grid_spec=pltpu.PrefetchScalarGridSpec(
            num_scalar_prefetch=0,
            grid=(grid_b,),
            in_specs=in_specs,
            out_specs=out_spec,
        ),
        compiler_params=pltpu.CompilerParams(
            dimension_semantics=("parallel",),
            vmem_limit_bytes=32 * 1024 * 1024,  # safe on v5e/v6e/v7x
        ),
    )(x_p, *param_arrays)

    return out[:B]


def init_params(key, input_size):
    """Deterministic synthetic parameters (shapes match the PyTorch module)."""
    ks = jax.random.split(key, 12)
    f32 = jnp.float32

    def lin(kw, kb, fan_in, fan_out):
        bound = 1.0 / jnp.sqrt(fan_in)
        w = jax.random.uniform(kw, (fan_in, fan_out), f32, -bound, bound)
        b = jax.random.uniform(kb, (1, fan_out), f32, -bound, bound)
        return w, b

    w1, b1 = lin(ks[0], ks[1], input_size, H1)
    w2, b2 = lin(ks[2], ks[3], H1, H2)
    w3, b3 = lin(ks[4], ks[5], H2, H3)
    w4, b4 = lin(ks[6], ks[7], H3, 1)

    # BatchNorm params: non-trivial values so the BN path is actually exercised.
    def bn(kg, km, c):
        gamma = 1.0 + 0.1 * jax.random.normal(kg, (1, c), f32)
        beta = 0.05 * jax.random.normal(km, (1, c), f32)
        mean = 0.1 * jax.random.normal(jax.random.fold_in(kg, 1), (1, c), f32)
        var = 1.0 + 0.2 * jax.random.uniform(jax.random.fold_in(km, 1), (1, c), f32)
        return gamma, beta, mean, var

    g1, bt1, m1, v1 = bn(ks[8], ks[9], H1)
    g2, bt2, m2, v2 = bn(ks[10], ks[11], H2)

    return (w1, b1, g1, bt1, m1, v1,
            w2, b2, g2, bt2, m2, v2,
            w3, b3, w4, b4)


def reference_forward(x, params):
    """Plain-JAX f32 reference mirroring PyTorch inference-mode semantics."""
    (w1, b1, g1, bt1, m1, v1,
     w2, b2, g2, bt2, m2, v2,
     w3, b3, w4, b4) = params
    h = x @ w1 + b1
    h = (h - m1) * jax.lax.rsqrt(v1 + EPS) * g1 + bt1
    h = jnp.maximum(h, 0.0)
    h = h @ w2 + b2
    h = (h - m2) * jax.lax.rsqrt(v2 + EPS) * g2 + bt2
    h = jnp.maximum(h, 0.0)
    h = jnp.maximum(h @ w3 + b3, 0.0)
    return h @ w4 + b4


if __name__ == "__main__":
    key = jax.random.PRNGKey(0)
    k_x, k_p = jax.random.split(key)

    # Batch deliberately NOT a multiple of 8/tile to exercise wrapper padding;
    # tile_b is capped to ceil(B/2) -> grid of 2 steps (spans both v7x TCs).
    batch, input_size = 333, 16
    x = jax.random.normal(k_x, (batch, input_size), jnp.float32)
    params = init_params(k_p, input_size)
    ref = reference_forward(x, params)

    # f32 path: tight check of folded-BN / VPU-head kernel semantics.
    out_f32 = jax.block_until_ready(
        option_pricer_forward(x, params, use_bf16=False)
    )
    assert out_f32.shape == (batch, 1), out_f32.shape
    assert jnp.allclose(out_f32, ref, atol=1e-3, rtol=1e-3), (
        float(jnp.max(jnp.abs(out_f32 - ref)))
    )

    # bf16 hidden-layer MXU path (default on all gens): relaxed tolerance.
    out_bf16 = jax.block_until_ready(
        option_pricer_forward(x, params, use_bf16=True)
    )
    assert out_bf16.shape == (batch, 1), out_bf16.shape
    assert jnp.allclose(out_bf16, ref, atol=3e-2, rtol=3e-2), (
        float(jnp.max(jnp.abs(out_bf16 - ref)))
    )

    print("KERNEL_OK")
</pallas_src>

<mosaic_0001>
module attributes {stable_mosaic.version = 11 : i64} {
  func.func @option_pricer_kernel(%arg0: i32, %arg1: memref<168x16xf32, #tpu.memory_space<vmem>>, %arg2: memref<16x256xf32, #tpu.memory_space<vmem>>, %arg3: memref<1x256xf32, #tpu.memory_space<vmem>>, %arg4: memref<256x128xf32, #tpu.memory_space<vmem>>, %arg5: memref<1x128xf32, #tpu.memory_space<vmem>>, %arg6: memref<128x64xf32, #tpu.memory_space<vmem>>, %arg7: memref<1x64xf32, #tpu.memory_space<vmem>>, %arg8: memref<1x64xf32, #tpu.memory_space<vmem>>, %arg9: memref<1x1xf32, #tpu.memory_space<vmem>>, %arg10: memref<168x1xf32, #tpu.memory_space<vmem>>) attributes {dimension_semantics = [#tpu.dimension_semantics<parallel>], iteration_bounds = array<i64: 2>, scalar_prefetch = 0 : i64, scratch_operands = 0 : i64, tpu.core_type = #tpu.core_type<tc>, window_params = [{transform_indices = @transform_0, window_bounds = array<i64: 168, 16>}, {pipeline_mode = #tpu.pipeline_mode<synchronous>, transform_indices = @transform_1, window_bounds = array<i64: 16, 256>}, {pipeline_mode = #tpu.pipeline_mode<synchronous>, transform_indices = @transform_2, window_bounds = array<i64: 1, 256>}, {pipeline_mode = #tpu.pipeline_mode<synchronous>, transform_indices = @transform_3, window_bounds = array<i64: 256, 128>}, {pipeline_mode = #tpu.pipeline_mode<synchronous>, transform_indices = @transform_4, window_bounds = array<i64: 1, 128>}, {pipeline_mode = #tpu.pipeline_mode<synchronous>, transform_indices = @transform_5, window_bounds = array<i64: 128, 64>}, {pipeline_mode = #tpu.pipeline_mode<synchronous>, transform_indices = @transform_6, window_bounds = array<i64: 1, 64>}, {pipeline_mode = #tpu.pipeline_mode<synchronous>, transform_indices = @transform_7, window_bounds = array<i64: 1, 64>}, {pipeline_mode = #tpu.pipeline_mode<synchronous>, transform_indices = @transform_8, window_bounds = array<i64: 1, 1>}, {transform_indices = @transform_9, window_bounds = array<i64: 168, 1>}]} {
    %c0 = arith.constant 0 : index
    %c0_0 = arith.constant 0 : index
    %0 = vector.load %arg1[%c0, %c0_0] : memref<168x16xf32, #tpu.memory_space<vmem>>, vector<168x16xf32>
    %c0_1 = arith.constant 0 : index
    %c0_2 = arith.constant 0 : index
    %1 = vector.load %arg2[%c0_1, %c0_2] : memref<16x256xf32, #tpu.memory_space<vmem>>, vector<16x256xf32>
    %cst = arith.constant dense<0.000000e+00> : vector<168x256xf32>
    %2 = tpu.matmul %0, %1, %cst {dimension_numbers = #tpu.dot_dimension_numbers<[1], [0], [0], [1], [0, 0, 1, 1], [], []>} : vector<168x16xf32>, vector<16x256xf32>, vector<168x256xf32> -> vector<168x256xf32>
    %c0_3 = arith.constant 0 : index
    %c0_4 = arith.constant 0 : index
    %3 = vector.load %arg3[%c0_3, %c0_4] : memref<1x256xf32, #tpu.memory_space<vmem>>, vector<1x256xf32>
    %4 = vector.broadcast %3 : vector<1x256xf32> to vector<168x256xf32>
    %5 = arith.addf %2, %4 : vector<168x256xf32>
    %cst_5 = arith.constant 0.000000e+00 : f32
    %6 = vector.broadcast %cst_5 : f32 to vector<168x256xf32>
    %7 = arith.maximumf %5, %6 : vector<168x256xf32>
    %c0_6 = arith.constant 0 : index
    %c0_7 = arith.constant 0 : index
    %8 = vector.load %arg4[%c0_6, %c0_7] : memref<256x128xf32, #tpu.memory_space<vmem>>, vector<256x128xf32>
    %cst_8 = arith.constant dense<0.000000e+00> : vector<168x128xf32>
    %9 = tpu.matmul %7, %8, %cst_8 {dimension_numbers = #tpu.dot_dimension_numbers<[1], [0], [0], [1], [0, 0, 1, 1], [], []>} : vector<168x256xf32>, vector<256x128xf32>, vector<168x128xf32> -> vector<168x128xf32>
    %c0_9 = arith.constant 0 : index
    %c0_10 = arith.constant 0 : index
    %10 = vector.load %arg5[%c0_9, %c0_10] : memref<1x128xf32, #tpu.memory_space<vmem>>, vector<1x128xf32>
    %11 = vector.broadcast %10 : vector<1x128xf32> to vector<168x128xf32>
    %12 = arith.addf %9, %11 : vector<168x128xf32>
    %cst_11 = arith.constant 0.000000e+00 : f32
    %13 = vector.broadcast %cst_11 : f32 to vector<168x128xf32>
    %14 = arith.maximumf %12, %13 : vector<168x128xf32>
    %c0_12 = arith.constant 0 : index
    %c0_13 = arith.constant 0 : index
    %15 = vector.load %arg6[%c0_12, %c0_13] : memref<128x64xf32, #tpu.memory_space<vmem>>, vector<128x64xf32>
    %cst_14 = arith.constant dense<0.000000e+00> : vector<168x64xf32>
    %16 = tpu.matmul %14, %15, %cst_14 {dimension_numbers = #tpu.dot_dimension_numbers<[1], [0], [0], [1], [0, 0, 1, 1], [], []>} : vector<168x128xf32>, vector<128x64xf32>, vector<168x64xf32> -> vector<168x64xf32>
    %c0_15 = arith.constant 0 : index
    %c0_16 = arith.constant 0 : index
    %17 = vector.load %arg7[%c0_15, %c0_16] : memref<1x64xf32, #tpu.memory_space<vmem>>, vector<1x64xf32>
    %18 = vector.broadcast %17 : vector<1x64xf32> to vector<168x64xf32>
    %19 = arith.addf %16, %18 : vector<168x64xf32>
    %cst_17 = arith.constant 0.000000e+00 : f32
    %20 = vector.broadcast %cst_17 : f32 to vector<168x64xf32>
    %21 = arith.maximumf %19, %20 : vector<168x64xf32>
    %c0_18 = arith.constant 0 : index
    %c0_19 = arith.constant 0 : index
    %22 = vector.load %arg8[%c0_18, %c0_19] : memref<1x64xf32, #tpu.memory_space<vmem>>, vector<1x64xf32>
    %23 = vector.broadcast %22 : vector<1x64xf32> to vector<168x64xf32>
    %24 = arith.mulf %21, %23 : vector<168x64xf32>
    %cst_20 = arith.constant dense<0.000000e+00> : vector<168xf32>
    %25 = vector.multi_reduction <add>, %24, %cst_20 [1] : vector<168x64xf32> to vector<168xf32>
    %26 = vector.shape_cast %25 : vector<168xf32> to vector<168x1xf32>
    %c0_21 = arith.constant 0 : index
    %c0_22 = arith.constant 0 : index
    %27 = vector.load %arg9[%c0_21, %c0_22] : memref<1x1xf32, #tpu.memory_space<vmem>>, vector<1x1xf32>
    %28 = vector.broadcast %27 : vector<1x1xf32> to vector<168x1xf32>
    %29 = arith.addf %26, %28 : vector<168x1xf32>
    %c0_23 = arith.constant 0 : index
    %c0_24 = arith.constant 0 : index
    %30 = vector.load %arg10[%c0_23, %c0_24] : memref<168x1xf32, #tpu.memory_space<vmem>>, vector<168x1xf32>
    tpu.vector_store %arg10[%c0_23, %c0_24], %29 {strides = array<i32>} : memref<168x1xf32, #tpu.memory_space<vmem>>, vector<168x1xf32>,
    return
  }
  func.func @transform_0(%arg0: i32) -> (i32, i32) {
    %c0_i32 = arith.constant 0 : i32
    %c0_i32_0 = arith.constant 0 : i32
    return %arg0, %c0_i32 : i32, i32
  }
  func.func @transform_1(%arg0: i32) -> (i32, i32) {
    %c0_i32 = arith.constant 0 : i32
    %c0_i32_0 = arith.constant 0 : i32
    %c0_i32_1 = arith.constant 0 : i32
    return %c0_i32, %c0_i32_0 : i32, i32
  }
  func.func @transform_2(%arg0: i32) -> (i32, i32) {
    %c0_i32 = arith.constant 0 : i32
    %c0_i32_0 = arith.constant 0 : i32
    %c0_i32_1 = arith.constant 0 : i32
    return %c0_i32, %c0_i32_0 : i32, i32
  }
  func.func @transform_3(%arg0: i32) -> (i32, i32) {
    %c0_i32 = arith.constant 0 : i32
    %c0_i32_0 = arith.constant 0 : i32
    %c0_i32_1 = arith.constant 0 : i32
    return %c0_i32, %c0_i32_0 : i32, i32
  }
  func.func @transform_4(%arg0: i32) -> (i32, i32) {
    %c0_i32 = arith.constant 0 : i32
    %c0_i32_0 = arith.constant 0 : i32
    %c0_i32_1 = arith.constant 0 : i32
    return %c0_i32, %c0_i32_0 : i32, i32
  }
  func.func @transform_5(%arg0: i32) -> (i32, i32) {
    %c0_i32 = arith.constant 0 : i32
    %c0_i32_0 = arith.constant 0 : i32
    %c0_i32_1 = arith.constant 0 : i32
    return %c0_i32, %c0_i32_0 : i32, i32
  }
  func.func @transform_6(%arg0: i32) -> (i32, i32) {
    %c0_i32 = arith.constant 0 : i32
    %c0_i32_0 = arith.constant 0 : i32
    %c0_i32_1 = arith.constant 0 : i32
    return %c0_i32, %c0_i32_0 : i32, i32
  }
  func.func @transform_7(%arg0: i32) -> (i32, i32) {
    %c0_i32 = arith.constant 0 : i32
    %c0_i32_0 = arith.constant 0 : i32
    %c0_i32_1 = arith.constant 0 : i32
    return %c0_i32, %c0_i32_0 : i32, i32
  }
  func.func @transform_8(%arg0: i32) -> (i32, i32) {
    %c0_i32 = arith.constant 0 : i32
    %c0_i32_0 = arith.constant 0 : i32
    %c0_i32_1 = arith.constant 0 : i32
    return %c0_i32, %c0_i32_0 : i32, i32
  }
  func.func @transform_9(%arg0: i32) -> (i32, i32) {
    %c0_i32 = arith.constant 0 : i32
    %c0_i32_0 = arith.constant 0 : i32
    return %arg0, %c0_i32 : i32, i32
  }
}

</mosaic_0001>

<llo_original>
// kernel: option_pricer_forward.1
$region0: #{option_pricer_forward.1}
  #allocation0 [shape = 'u32[]', space=smem, size = 0x4, offset = 0x4, fixed_abs, tag = 'smem constant byte address 0x4 - core index']
  #allocation1 [shape = 'u32[144,128]{1,0:T(1,128)}', space=vmem, size = 0x12000, scoped, tag = 'internal scratch']
  #allocation2 [shape = 'f32[1,1]{1,0:T(1,128)S(1)}', space=vmem, size = 0x200, scoped, tag = 'scoped memory for option_pricer_forward.1']
  %s0 = inlined_call_operand.vmem [shape: f32[336,16], index: 0, kind: input, shape index: {}]
  %s1 = inlined_call_operand.vmem [shape: f32[16,256], index: 1, kind: input, shape index: {}]
  %s2 = inlined_call_operand.vmem [shape: f32[1,256], index: 2, kind: input, shape index: {}]
  %s3 = inlined_call_operand.vmem [shape: f32[256,128], index: 3, kind: input, shape index: {}]
  %s4 = inlined_call_operand.vmem [shape: f32[1,128], index: 4, kind: input, shape index: {}]
  %s5 = inlined_call_operand.vmem [shape: f32[128,64], index: 5, kind: input, shape index: {}]
  %s6 = inlined_call_operand.vmem [shape: f32[1,64], index: 6, kind: input, shape index: {}]
  %s7 = inlined_call_operand.vmem [shape: f32[1,64], index: 7, kind: input, shape index: {}]
  %s8 = inlined_call_operand.<no memory space> [shape: f32[1,1], index: 8, kind: input, shape index: {}]
  %s9 = inlined_call_operand.vmem [shape: f32[336,1], index: 9, kind: output, shape index: {}]
  %s10 = sld [smem:[#allocation0]]
  $region69: #{option_pricer_forward.1} parent=0
    _
  %s12 = ssub.s32 1, %s10
  %s13 = scalar_select 0, %s12, %s10
  %v14 = vstv %s8
  %15 = vst [vmem:[#allocation2] sm:$0x1] %v14
  loop: start=0, step=1, limit=4
  $region2: #{option_pricer_forward.1} parent=0 // loop_pre_header
    _
  $region3: #{option_pricer_forward.1} parent=0 // loop_header
    %s17 = sphi 0, %s21
    %p18 = scmp.ge.s32.totalorder %s17, 4
    %s27 = sphi 0, %s29
    %s30 = sphi 0, %s27
    %s31 = sphi 0, %s30
    %s47 = sphi 0, %s31
    %s51 = sphi 0, %s51
    %s53 = sphi 0, %s51
    %s54 = sphi 0, %s53
    %s68 = sphi 0, %s54
    %s72 = sphi 0, %s72
    %s74 = sphi 0, %s72
    %s75 = sphi 0, %s74
    %s89 = sphi 0, %s75
    %s93 = sphi 0, %s93
    %s95 = sphi 0, %s93
    %s96 = sphi 0, %s95
    %s110 = sphi 0, %s96
    %s114 = sphi 0, %s114
    %s116 = sphi 0, %s114
    %s117 = sphi 0, %s116
    %s131 = sphi 0, %s117
    %s135 = sphi 0, %s135
    %s137 = sphi 0, %s135
    %s138 = sphi 0, %s137
    %s152 = sphi 0, %s138
    %s156 = sphi 0, %s156
    %s158 = sphi 0, %s156
    %s159 = sphi 0, %s158
    %s173 = sphi 0, %s159
    %s177 = sphi 0, %s177
    %s179 = sphi 0, %s177
    %s180 = sphi 0, %s179
    %s194 = sphi 0, %s180
    %s198 = sphi 0, %s198
    %s200 = sphi 0, %s198
    %s201 = sphi 0, %s200
    %s215 = sphi 0, %s201
    %s221 = sphi 0, %s223
    %s224 = sphi 0, %s221
    %s225 = sphi 0, %s224
    %s241 = sphi 0, %s225
  $region4: #{option_pricer_forward.1} parent=0 // loop_header_branch
    %20 = sbr.rel (%p18) target = $region8
  $region5: #{option_pricer_forward.1} parent=0 // loop_body
    %s22 = ssub.s32 %s17, 1
    %s23 = ssub.s32 %s17, 2
    %s24 = sadd.s32 %s17, 1
    %s25 = ssub.s32 %s17, %s24
    %p26 = scmp.eq.s32.totalorder %s25, 0
    %s28 = sadd.s32 %s27, 1
    %s29 = scalar_select %p26, %s27, %s28
    %p32 = pneg %p26
    %p33 = scmp.eq.s32.totalorder %s17, 1
    %p34 = por %p32, %p33
    %p35 = scmp.ne.s32.totalorder %s27, %s30
    %p36 = scmp.eq.s32.totalorder %s17, 0
    %p37 = por %p35, %p36
    %p38 = scmp.ne.s32.totalorder %s27, %s30
    %p39 = scmp.eq.s32.totalorder %s22, 1
    %p40 = por %p38, %p39
    %p41 = scmp.ne.s32.totalorder %s30, %s31
    %p42 = scmp.eq.s32.totalorder %s22, 0
    %p43 = por %p41, %p42
    %p44 = scmp.ne.s32.totalorder %s30, %s31
    %p45 = scmp.eq.s32.totalorder %s23, 1
    %p46 = por %p44, %p45
    %p48 = scmp.ne.s32.totalorder %s31, %s47
    %p49 = scmp.eq.s32.totalorder %s23, 0
    %p50 = por %p48, %p49
    %s52 = sadd.s32 %s51, 1
    %p55 = scmp.eq.s32.totalorder %s17, 1
    %p56 = scmp.ne.s32.totalorder %s51, %s53
    %p57 = scmp.eq.s32.totalorder %s17, 0
    %p58 = por %p56, %p57
    %p59 = scmp.ne.s32.totalorder %s51, %s53
    %p60 = scmp.eq.s32.totalorder %s22, 1
    %p61 = por %p59, %p60
    %p62 = scmp.ne.s32.totalorder %s53, %s54
    %p63 = scmp.eq.s32.totalorder %s22, 0
    %p64 = por %p62, %p63
    %p65 = scmp.ne.s32.totalorder %s53, %s54
    %p66 = scmp.eq.s32.totalorder %s23, 1
    %p67 = por %p65, %p66
    %p69 = scmp.ne.s32.totalorder %s54, %s68
    %p70 = scmp.eq.s32.totalorder %s23, 0
    %p71 = por %p69, %p70
    %s73 = sadd.s32 %s72, 1
    %p76 = scmp.eq.s32.totalorder %s17, 1
    %p77 = scmp.ne.s32.totalorder %s72, %s74
    %p78 = scmp.eq.s32.totalorder %s17, 0
    %p79 = por %p77, %p78
    %p80 = scmp.ne.s32.totalorder %s72, %s74
    %p81 = scmp.eq.s32.totalorder %s22, 1
    %p82 = por %p80, %p81
    %p83 = scmp.ne.s32.totalorder %s74, %s75
    %p84 = scmp.eq.s32.totalorder %s22, 0
    %p85 = por %p83, %p84
    %p86 = scmp.ne.s32.totalorder %s74, %s75
    %p87 = scmp.eq.s32.totalorder %s23, 1
    %p88 = por %p86, %p87
    %p90 = scmp.ne.s32.totalorder %s75, %s89
    %p91 = scmp.eq.s32.totalorder %s23, 0
    %p92 = por %p90, %p91
    %s94 = sadd.s32 %s93, 1
    %p97 = scmp.eq.s32.totalorder %s17, 1
    %p98 = scmp.ne.s32.totalorder %s93, %s95
    %p99 = scmp.eq.s32.totalorder %s17, 0
    %p100 = por %p98, %p99
    %p101 = scmp.ne.s32.totalorder %s93, %s95
    %p102 = scmp.eq.s32.totalorder %s22, 1
    %p103 = por %p101, %p102
    %p104 = scmp.ne.s32.totalorder %s95, %s96
    %p105 = scmp.eq.s32.totalorder %s22, 0
    %p106 = por %p104, %p105
    %p107 = scmp.ne.s32.totalorder %s95, %s96
    %p108 = scmp.eq.s32.totalorder %s23, 1
    %p109 = por %p107, %p108
    %p111 = scmp.ne.s32.totalorder %s96, %s110
    %p112 = scmp.eq.s32.totalorder %s23, 0
    %p113 = por %p111, %p112
    %s115 = sadd.s32 %s114, 1
    %p118 = scmp.eq.s32.totalorder %s17, 1
    %p119 = scmp.ne.s32.totalorder %s114, %s116
    %p120 = scmp.eq.s32.totalorder %s17, 0
    %p121 = por %p119, %p120
    %p122 = scmp.ne.s32.totalorder %s114, %s116
    %p123 = scmp.eq.s32.totalorder %s22, 1
    %p124 = por %p122, %p123
    %p125 = scmp.ne.s32.totalorder %s116, %s117
    %p126 = scmp.eq.s32.totalorder %s22, 0
    %p127 = por %p125, %p126
    %p128 = scmp.ne.s32.totalorder %s116, %s117
    %p129 = scmp.eq.s32.totalorder %s23, 1
    %p130 = por %p128, %p129
    %p132 = scmp.ne.s32.totalorder %s117, %s131
    %p133 = scmp.eq.s32.totalorder %s23, 0
    %p134 = por %p132, %p133
    %s136 = sadd.s32 %s135, 1
    %p139 = scmp.eq.s32.totalorder %s17, 1
    %p140 = scmp.ne.s32.totalorder %s135, %s137
    %p141 = scmp.eq.s32.totalorder %s17, 0
    %p142 = por %p140, %p141
    %p143 = scmp.ne.s32.totalorder %s135, %s137
    %p144 = scmp.eq.s32.totalorder %s22, 1
    %p145 = por %p143, %p144
    %p146 = scmp.ne.s32.totalorder %s137, %s138
    %p147 = scmp.eq.s32.totalorder %s22, 0
    %p148 = por %p146, %p147
    %p149 = scmp.ne.s32.totalorder %s137, %s138
    %p150 = scmp.eq.s32.totalorder %s23, 1
    %p151 = por %p149, %p150
    %p153 = scmp.ne.s32.totalorder %s138, %s152
    %p154 = scmp.eq.s32.totalorder %s23, 0
    %p155 = por %p153, %p154
    %s157 = sadd.s32 %s156, 1
    %p160 = scmp.eq.s32.totalorder %s17, 1
    %p161 = scmp.ne.s32.totalorder %s156, %s158
    %p162 = scmp.eq.s32.totalorder %s17, 0
    %p163 = por %p161, %p162
    %p164 = scmp.ne.s32.totalorder %s156, %s158
    %p165 = scmp.eq.s32.totalorder %s22, 1
    %p166 = por %p164, %p165
    %p167 = scmp.ne.s32.totalorder %s158, %s159
    %p168 = scmp.eq.s32.totalorder %s22, 0
    %p169 = por %p167, %p168
    %p170 = scmp.ne.s32.totalorder %s158, %s159
    %p171 = scmp.eq.s32.totalorder %s23, 1
    %p172 = por %p170, %p171
    %p174 = scmp.ne.s32.totalorder %s159, %s173
    %p175 = scmp.eq.s32.totalorder %s23, 0
    %p176 = por %p174, %p175
    %s178 = sadd.s32 %s177, 1
    %p181 = scmp.eq.s32.totalorder %s17, 1
    %p182 = scmp.ne.s32.totalorder %s177, %s179
    %p183 = scmp.eq.s32.totalorder %s17, 0
    %p184 = por %p182, %p183
    %p185 = scmp.ne.s32.totalorder %s177, %s179
    %p186 = scmp.eq.s32.totalorder %s22, 1
    %p187 = por %p185, %p186
    %p188 = scmp.ne.s32.totalorder %s179, %s180
    %p189 = scmp.eq.s32.totalorder %s22, 0
    %p190 = por %p188, %p189
    %p191 = scmp.ne.s32.totalorder %s179, %s180
    %p192 = scmp.eq.s32.totalorder %s23, 1
    %p193 = por %p191, %p192
    %p195 = scmp.ne.s32.totalorder %s180, %s194
    %p196 = scmp.eq.s32.totalorder %s23, 0
    %p197 = por %p195, %p196
    %s199 = sadd.s32 %s198, 1
    %p202 = scmp.eq.s32.totalorder %s17, 1
    %p203 = scmp.ne.s32.totalorder %s198, %s200
    %p204 = scmp.eq.s32.totalorder %s17, 0
    %p205 = por %p203, %p204
    %p206 = scmp.ne.s32.totalorder %s198, %s200
    %p207 = scmp.eq.s32.totalorder %s22, 1
    %p208 = por %p206, %p207
    %p209 = scmp.ne.s32.totalorder %s200, %s201
    %p210 = scmp.eq.s32.totalorder %s22, 0
    %p211 = por %p209, %p210
    %p212 = scmp.ne.s32.totalorder %s200, %s201
    %p213 = scmp.eq.s32.totalorder %s23, 1
    %p214 = por %p212, %p213
    %p216 = scmp.ne.s32.totalorder %s201, %s215
    %p217 = scmp.eq.s32.totalorder %s23, 0
    %p218 = por %p216, %p217
    %s219 = ssub.s32 %s17, %s24
    %p220 = scmp.eq.s32.totalorder %s219, 0
    %s222 = sadd.s32 %s221, 1
    %s223 = scalar_select %p220, %s221, %s222
    %p226 = pneg %p220
    %p227 = scmp.eq.s32.totalorder %s17, 1
    %p228 = por %p226, %p227
    %p229 = scmp.ne.s32.totalorder %s221, %s224
    %p230 = scmp.eq.s32.totalorder %s17, 0
    %p231 = por %p229, %p230
    %p232 = scmp.ne.s32.totalorder %s221, %s224
    %p233 = scmp.eq.s32.totalorder %s22, 1
    %p234 = por %p232, %p233
    %p235 = scmp.ne.s32.totalorder %s224, %s225
    %p236 = scmp.eq.s32.totalorder %s22, 0
    %p237 = por %p235, %p236
    %p238 = scmp.ne.s32.totalorder %s224, %s225
    %p239 = scmp.eq.s32.totalorder %s23, 1
    %p240 = por %p238, %p239
    %p242 = scmp.ne.s32.totalorder %s225, %s241
    %p243 = scmp.eq.s32.totalorder %s23, 0
    %p244 = por %p242, %p243
    %p245 = scmp.le.s32.totalorder 1, %s17
    %p246 = scmp.lt.s32.totalorder %s17, 3
    %p247 = pnand %p245, %p246
    %p248 = pneg %p247
    // Predicated region
    $region9: #{option_pricer_forward.1} parent=5 // pred_check
      _
    $region10: #{option_pricer_forward.1} parent=5 // pred_check_branch
      %250 = sbr.rel (%p247) target = $region12
    $region11: #{option_pricer_forward.1} parent=5 // pred_region
      %s251 = ssub.s32 %s17, 1
      // Predicated region
      $region13: #{option_pricer_forward.1} parent=11 // pred_check
        %p252 = pneg %p64
      $region14: #{option_pricer_forward.1} parent=11 // pred_check_branch
        %254 = sbr.rel (%p252) target = $region16
      $region15: #{option_pricer_forward.1} parent=11 // pred_region
        _
      $region16: #{option_pricer_forward.1} parent=11 // pred_fallthru
        _
      // Predicated region
      $region17: #{option_pricer_forward.1} parent=11 // pred_check
        %p255 = pneg %p85
      $region18: #{option_pricer_forward.1} parent=11 // pred_check_branch
        %257 = sbr.rel (%p255) target = $region20
      $region19: #{option_pricer_forward.1} parent=11 // pred_region
        _
      $region20: #{option_pricer_forward.1} parent=11 // pred_fallthru
        _
      // Predicated region
      $region21: #{option_pricer_forward.1} parent=11 // pred_check
        %p258 = pneg %p106
      $region22: #{option_pricer_forward.1} parent=11 // pred_check_branch
        %260 = sbr.rel (%p258) target = $region24
      $region23: #{option_pricer_forward.1} parent=11 // pred_region
        _
      $region24: #{option_pricer_forward.1} parent=11 // pred_fallthru
        _
      // Predicated region
      $region25: #{option_pricer_forward.1} parent=11 // pred_check
        %p261 = pneg %p127
      $region26: #{option_pricer_forward.1} parent=11 // pred_check_branch
        %263 = sbr.rel (%p261) target = $region28
      $region27: #{option_pricer_forward.1} parent=11 // pred_region
        _
      $region28: #{option_pricer_forward.1} parent=11 // pred_fallthru
        _
      // Predicated region
      $region29: #{option_pricer_forward.1} parent=11 // pred_check
        %p264 = pneg %p148
      $region30: #{option_pricer_forward.1} parent=11 // pred_check_branch
        %266 = sbr.rel (%p264) target = $region32
      $region31: #{option_pricer_forward.1} parent=11 // pred_region
        _
      $region32: #{option_pricer_forward.1} parent=11 // pred_fallthru
        _
      // Predicated region
      $region33: #{option_pricer_forward.1} parent=11 // pred_check
        %p267 = pneg %p169
      $region34: #{option_pricer_forward.1} parent=11 // pred_check_branch
        %269 = sbr.rel (%p267) target = $region36
      $region35: #{option_pricer_forward.1} parent=11 // pred_region
        _
      $region36: #{option_pricer_forward.1} parent=11 // pred_fallthru
        _
      // Predicated region
      $region37: #{option_pricer_forward.1} parent=11 // pred_check
        %p270 = pneg %p190
      $region38: #{option_pricer_forward.1} parent=11 // pred_check_branch
        %272 = sbr.rel (%p270) target = $region40
      $region39: #{option_pricer_forward.1} parent=11 // pred_region
        _
      $region40: #{option_pricer_forward.1} parent=11 // pred_fallthru
        _
      // Predicated region
      $region41: #{option_pricer_forward.1} parent=11 // pred_check
        %p273 = pneg %p211
      $region42: #{option_pricer_forward.1} parent=11 // pred_check_branch
        %275 = sbr.rel (%p273) target = $region44
      $region43: #{option_pricer_forward.1} parent=11 // pred_region
        _
      $region44: #{option_pricer_forward.1} parent=11 // pred_fallthru
        _
    $region12: #{option_pricer_forward.1} parent=5 // pred_fallthru
      _
    %p276 = scmp.lt.s32.totalorder %s17, 2
    // Predicated region
    $region45: #{option_pricer_forward.1} parent=5 // pred_check
      %p277 = pneg %p276
    $region46: #{option_pricer_forward.1} parent=5 // pred_check_branch
      %279 = sbr.rel (%p277) target = $region48
    $region47: #{option_pricer_forward.1} parent=5 // pred_region
      // Predicated region
      $region49: #{option_pricer_forward.1} parent=47 // pred_check
        %p280 = pneg %p37
      $region50: #{option_pricer_forward.1} parent=47 // pred_check_branch
        %282 = sbr.rel (%p280) target = $region52
      $region51: #{option_pricer_forward.1} parent=47 // pred_region
        %s283 = smul.u32 21, %s17
        %p284 = scmp.lt.s32.totalorder %s283, 41
        %s285 = scalar_select %p284, %s283, 41
        %s286 = smul.addr %s285, 8
        %s287 = scalar_lea.vmem %s0, %s286
        %s288 = smul.u32 21, %s17
      $region52: #{option_pricer_forward.1} parent=47 // pred_fallthru
        _
    $region48: #{option_pricer_forward.1} parent=5 // pred_fallthru
      _
    %p289 = scmp.le.s32.totalorder 1, %s17
    %p290 = scmp.lt.s32.totalorder %s17, 3
    %p291 = pnand %p289, %p290
    %p292 = pneg %p291
    // Predicated region
    $region53: #{option_pricer_forward.1} parent=5 // pred_check
      _
    $region54: #{option_pricer_forward.1} parent=5 // pred_check_branch
      %294 = sbr.rel (%p291) target = $region56
    $region55: #{option_pricer_forward.1} parent=5 // pred_region
      %s295 = ssub.s32 %s17, 1
      %s296 = smul.u32 21, %s22
      %p297 = scmp.lt.s32.totalorder %s296, 41
      %s298 = scalar_select %p297, %s296, 41
      %s299 = smul.addr %s298, 8
      %s300 = scalar_lea.vmem %s0, %s299
      %p301 = pneg %p43
      %p302 = pneg %p40
      %p303 = pneg %p64
      %p304 = pneg %p61
      %p305 = pneg %p85
      %p306 = pneg %p82
      %p307 = pneg %p106
      %p308 = pneg %p103
      %p309 = pneg %p127
      %p310 = pneg %p124
      %p311 = pneg %p148
      %p312 = pneg %p145
      %p313 = pneg %p169
      %p314 = pneg %p166
      %p315 = pneg %p190
      %p316 = pneg %p187
      %p317 = pneg %p211
      %p318 = pneg %p208
      %p319 = pneg %p237
      %p320 = pneg %p234
      %s321 = smul.u32 21, %s22
      %p322 = scmp.lt.s32.totalorder %s321, 41
      %s323 = scalar_select %p322, %s321, 41
      %s324 = smul.addr %s323, 8
      %s325 = scalar_lea.vmem %s9, %s324
      %s326 = smul.u32 21, %s22
      %p327 = scmp.lt.s32.totalorder %s326, 41
      %s328 = scalar_select %p327, %s326, 41
      %s329 = smul.addr %s328, 8
      %s330 = scalar_lea.vmem %s0, %s329
      %s331 = smul.u32 21, %s22
      %s332 = smul.u32 21, %s22
      %p333 = scmp.lt.s32.totalorder %s332, 41
      %s334 = scalar_select %p333, %s332, 41
      %s335 = smul.addr %s334, 8
      %s336 = scalar_lea.vmem %s9, %s335
      %s337 = smul.u32 21, %s22
      %v338 = vld [vmem:[%s330] sm:$0xff]
      %v339 = vld [vmem:[%s330 + $0x8] sm:$0xff]
      %v340 = vld [vmem:[%s330 + $0x10] sm:$0xff]
      %v341 = vld [vmem:[%s330 + $0x18] sm:$0xff]
      %v342 = vld [vmem:[%s330 + $0x20] sm:$0xff]
      %v343 = vld [vmem:[%s330 + $0x28] sm:$0xff]
      %v344 = vld [vmem:[%s330 + $0x30] sm:$0xff]
      %v345 = vld [vmem:[%s330 + $0x38] sm:$0xff]
      %v346 = vld [vmem:[%s330 + $0x40] sm:$0xff]
      %v347 = vld [vmem:[%s330 + $0x48] sm:$0xff]
      %v348 = vld [vmem:[%s330 + $0x50] sm:$0xff]
      %v349 = vld [vmem:[%s330 + $0x58] sm:$0xff]
      %v350 = vld [vmem:[%s330 + $0x60] sm:$0xff]
      %v351 = vld [vmem:[%s330 + $0x68] sm:$0xff]
      %v352 = vld [vmem:[%s330 + $0x70] sm:$0xff]
      %v353 = vld [vmem:[%s330 + $0x78] sm:$0xff]
      %v354 = vld [vmem:[%s330 + $0x80] sm:$0xff]
      %v355 = vld [vmem:[%s330 + $0x88] sm:$0xff]
      %v356 = vld [vmem:[%s330 + $0x90] sm:$0xff]
      %v357 = vld [vmem:[%s330 + $0x98] sm:$0xff]
      %v358 = vld [vmem:[%s330 + $0xa0] sm:$0xff]
      %v359 = vld [vmem:[%s1] sm:$0xff]
      %v360 = vld [vmem:[%s1 + $0x8] sm:$0xff]
      %v361 = vld [vmem:[%s1 + $0x10] sm:$0xff]
      %v362 = vld [vmem:[%s1 + $0x18] sm:$0xff]
      %v363 = vld [vmem:[%s2] sm:$0x3]
      %v365 = vlaneseq
      %v366 = vshrl.u32 %v365, 7
      %v367 = vsub.s32 0, %v366
      %v368 = vrot.slane %v363, %v367
      %v369 = vlaneseq
      %v370 = vshrl.u32 %v369, 7
      %v371 = vsub.s32 1, %v370
      %v372 = vrot.slane %v363, %v371
      %vm375 = vcmask 130048
      %v377 = vsel %vm375, %v338, 0
      %v380 = vsel %vm375, %v339, 0
      %v383 = vsel %vm375, %v340, 0
      %v386 = vsel %vm375, %v341, 0
      %v389 = vsel %vm375, %v342, 0
      %v392 = vsel %vm375, %v343, 0
      %v395 = vsel %vm375, %v344, 0
      %v398 = vsel %vm375, %v345, 0
      %v401 = vsel %vm375, %v346, 0
      %v404 = vsel %vm375, %v347, 0
      %v407 = vsel %vm375, %v348, 0
      %v410 = vsel %vm375, %v349, 0
      %v413 = vsel %vm375, %v350, 0
      %v416 = vsel %vm375, %v351, 0
      %v419 = vsel %vm375, %v352, 0
      %v422 = vsel %vm375, %v353, 0
      %v425 = vsel %vm375, %v354, 0
      %v428 = vsel %vm375, %v355, 0
      %v431 = vsel %vm375, %v356, 0
      %v434 = vsel %vm375, %v357, 0
      %v437 = vsel %vm375, %v358, 0
      %439 = vmatprep.subr.mxu0 0.0
      %440 = vmatpush1.msra.mxu0 0.0
      %441 = vmatprep.subr.mxu0 0.0
      %442 = vmatpush1.msra.mxu0 0.0
      %443 = vmatprep.subr.mxu0 0.0
      %444 = vmatpush1.msra.mxu0 0.0
      %445 = vmatprep.subr.mxu0 0.0
      %446 = vmatpush1.msra.mxu0 0.0
      %447 = vmatprep.subr.mxu0 0.0
      %448 = vmatpush1.msra.mxu0 0.0
      %449 = vmatprep.subr.mxu0 0.0
      %450 = vmatpush1.msra.mxu0 0.0
      %451 = vmatprep.subr.mxu0 0.0
      %452 = vmatpush1.msra.mxu0 0.0
      %453 = vmatprep.subr.mxu0 0.0
      %454 = vmatpush1.msra.mxu0 0.0
      %455 = vmatprep.subr.mxu0 0.0
      %456 = vmatpush1.msra.mxu0 0.0
      %457 = vmatprep.subr.mxu0 0.0
      %458 = vmatpush1.msra.mxu0 0.0
      %459 = vmatprep.subr.mxu0 0.0
      %460 = vmatpush1.msra.mxu0 0.0
      %461 = vmatprep.subr.mxu0 0.0
      %462 = vmatpush1.msra.mxu0 0.0
      %463 = vmatprep.subr.mxu0 0.0
      %464 = vmatpush1.msra.mxu0 0.0
      %465 = vmatprep.subr.mxu0 0.0
      %466 = vmatpush1.msra.mxu0 0.0
      %467 = vmatprep.subr.mxu0 %v362
      %468 = vmatpush1.msra.mxu0 %v361
      %469 = vmatprep.subr.mxu0 %v360
      %470 = vmatpush1.msra.mxu0 %v359
      %471 = vmatprep.subr.mxu0 0.0
      %472 = vmatpush2.msra.mxu0 0.0
      %473 = vmatprep.subr.mxu0 0.0
      %474 = vmatpush2.msra.mxu0 0.0
      %475 = vmatprep.subr.mxu0 0.0
      %476 = vmatpush2.msra.mxu0 0.0
      %477 = vmatprep.subr.mxu0 0.0
      %478 = vmatpush2.msra.mxu0 0.0
      %479 = vmatprep.subr.mxu0 0.0
      %480 = vmatpush2.msra.mxu0 0.0
      %481 = vmatprep.subr.mxu0 0.0
      %482 = vmatpush2.msra.mxu0 0.0
      %483 = vmatprep.subr.mxu0 0.0
      %484 = vmatpush2.msra.mxu0 0.0
      %485 = vmatprep.subr.mxu0 0.0
      %486 = vmatpush2.msra.mxu0 0.0
      %487 = vmatprep.subr.mxu0 0.0
      %488 = vmatpush2.msra.mxu0 0.0
      %489 = vmatprep.subr.mxu0 0.0
      %490 = vmatpush2.msra.mxu0 0.0
      %491 = vmatprep.subr.mxu0 0.0
      %492 = vmatpush2.msra.mxu0 0.0
      %493 = vmatprep.subr.mxu0 0.0
      %494 = vmatpush2.msra.mxu0 0.0
      %495 = vmatprep.subr.mxu0 0.0
      %496 = vmatpush2.msra.mxu0 0.0
      %497 = vmatprep.subr.mxu0 0.0
      %498 = vmatpush2.msra.mxu0 0.0
      %499 = vmatprep.subr.mxu0 0.0
      %500 = vmatpush2.msra.mxu0 0.0
      %501 = vmatprep.subr.mxu0 0.0
      %502 = vmatpush2.msra.mxu0 0.0
      %503 = vmatprep.mubr.f32.mxu0 0.0
      %504 = vmatmul.mubr.f32.gmra.mxu0 %v377
      %v505 = vpop.f32.mrf.mxu0
      %v506 = vadd.f32 %v368, %v505
      %v507 = vpop.f32.mrf.mxu0
      %v508 = vadd.f32 %v372, %v507
      %509 = vmatprep.mubr.f32.mxu0 0.0
      %510 = vmatmul.mubr.f32.gmra.mxu0 %v380
      %v511 = vpop.f32.mrf.mxu0
      %v512 = vadd.f32 %v368, %v511
      %v513 = vpop.f32.mrf.mxu0
      %v514 = vadd.f32 %v372, %v513
      %515 = vmatprep.mubr.f32.mxu0 0.0
      %516 = vmatmul.mubr.f32.gmra.mxu0 %v383
      %v517 = vpop.f32.mrf.mxu0
      %v518 = vadd.f32 %v368, %v517
      %v519 = vpop.f32.mrf.mxu0
      %v520 = vadd.f32 %v372, %v519
      %521 = vmatprep.mubr.f32.mxu0 0.0
      %522 = vmatmul.mubr.f32.gmra.mxu0 %v386
      %v523 = vpop.f32.mrf.mxu0
      %v524 = vadd.f32 %v368, %v523
      %v525 = vpop.f32.mrf.mxu0
      %v526 = vadd.f32 %v372, %v525
      %527 = vmatprep.mubr.f32.mxu0 0.0
      %528 = vmatmul.mubr.f32.gmra.mxu0 %v389
      %v529 = vpop.f32.mrf.mxu0
      %v530 = vadd.f32 %v368, %v529
      %v531 = vpop.f32.mrf.mxu0
      %v532 = vadd.f32 %v372, %v531
      %533 = vmatprep.mubr.f32.mxu0 0.0
      %534 = vmatmul.mubr.f32.gmra.mxu0 %v392
      %v535 = vpop.f32.mrf.mxu0
      %v536 = vadd.f32 %v368, %v535
      %v537 = vpop.f32.mrf.mxu0
      %v538 = vadd.f32 %v372, %v537
      %539 = vmatprep.mubr.f32.mxu0 0.0
      %540 = vmatmul.mubr.f32.gmra.mxu0 %v395
      %v541 = vpop.f32.mrf.mxu0
      %v542 = vadd.f32 %v368, %v541
      %v543 = vpop.f32.mrf.mxu0
      %v544 = vadd.f32 %v372, %v543
      %545 = vmatprep.mubr.f32.mxu0 0.0
      %546 = vmatmul.mubr.f32.gmra.mxu0 %v398
      %v547 = vpop.f32.mrf.mxu0
      %v548 = vadd.f32 %v368, %v547
      %v549 = vpop.f32.mrf.mxu0
      %v550 = vadd.f32 %v372, %v549
      %551 = vmatprep.mubr.f32.mxu0 0.0
      %552 = vmatmul.mubr.f32.gmra.mxu0 %v401
      %v553 = vpop.f32.mrf.mxu0
      %v554 = vadd.f32 %v368, %v553
      %v555 = vpop.f32.mrf.mxu0
      %v556 = vadd.f32 %v372, %v555
      %557 = vmatprep.mubr.f32.mxu0 0.0
      %558 = vmatmul.mubr.f32.gmra.mxu0 %v404
      %v559 = vpop.f32.mrf.mxu0
      %v560 = vadd.f32 %v368, %v559
      %v561 = vpop.f32.mrf.mxu0
      %v562 = vadd.f32 %v372, %v561
      %563 = vmatprep.mubr.f32.mxu0 0.0
      %564 = vmatmul.mubr.f32.gmra.mxu0 %v407
      %v565 = vpop.f32.mrf.mxu0
      %v566 = vadd.f32 %v368, %v565
      %v567 = vpop.f32.mrf.mxu0
      %v568 = vadd.f32 %v372, %v567
      %569 = vmatprep.mubr.f32.mxu0 0.0
      %570 = vmatmul.mubr.f32.gmra.mxu0 %v410
      %v571 = vpop.f32.mrf.mxu0
      %v572 = vadd.f32 %v368, %v571
      %v573 = vpop.f32.mrf.mxu0
      %v574 = vadd.f32 %v372, %v573
      %575 = vmatprep.mubr.f32.mxu0 0.0
      %576 = vmatmul.mubr.f32.gmra.mxu0 %v413
      %v577 = vpop.f32.mrf.mxu0
      %v578 = vadd.f32 %v368, %v577
      %v579 = vpop.f32.mrf.mxu0
      %v580 = vadd.f32 %v372, %v579
      %581 = vmatprep.mubr.f32.mxu0 0.0
      %582 = vmatmul.mubr.f32.gmra.mxu0 %v416
      %v583 = vpop.f32.mrf.mxu0
      %v584 = vadd.f32 %v368, %v583
      %v585 = vpop.f32.mrf.mxu0
      %v586 = vadd.f32 %v372, %v585
      %587 = vmatprep.mubr.f32.mxu0 0.0
      %588 = vmatmul.mubr.f32.gmra.mxu0 %v419
      %v589 = vpop.f32.mrf.mxu0
      %v590 = vadd.f32 %v368, %v589
      %v591 = vpop.f32.mrf.mxu0
      %v592 = vadd.f32 %v372, %v591
      %593 = vmatprep.mubr.f32.mxu0 0.0
      %594 = vmatmul.mubr.f32.gmra.mxu0 %v422
      %v595 = vpop.f32.mrf.mxu0
      %v596 = vadd.f32 %v368, %v595
      %v597 = vpop.f32.mrf.mxu0
      %v598 = vadd.f32 %v372, %v597
      %599 = vmatprep.mubr.f32.mxu0 0.0
      %600 = vmatmul.mubr.f32.gmra.mxu0 %v425
      %v601 = vpop.f32.mrf.mxu0
      %v602 = vadd.f32 %v368, %v601
      %v603 = vpop.f32.mrf.mxu0
      %v604 = vadd.f32 %v372, %v603
      %605 = vmatprep.mubr.f32.mxu0 0.0
      %606 = vmatmul.mubr.f32.gmra.mxu0 %v428
      %v607 = vpop.f32.mrf.mxu0
      %v608 = vadd.f32 %v368, %v607
      %v609 = vpop.f32.mrf.mxu0
      %v610 = vadd.f32 %v372, %v609
      %611 = vmatprep.mubr.f32.mxu0 0.0
      %612 = vmatmul.mubr.f32.gmra.mxu0 %v431
      %v613 = vpop.f32.mrf.mxu0
      %v614 = vadd.f32 %v368, %v613
      %v615 = vpop.f32.mrf.mxu0
      %v616 = vadd.f32 %v372, %v615
      %617 = vmatprep.mubr.f32.mxu0 0.0
      %618 = vmatmul.mubr.f32.gmra.mxu0 %v434
      %v619 = vpop.f32.mrf.mxu0
      %v620 = vadd.f32 %v368, %v619
      %v621 = vpop.f32.mrf.mxu0
      %v622 = vadd.f32 %v372, %v621
      %623 = vmatprep.mubr.f32.mxu0 0.0
      %624 = vmatmul.mubr.f32.gmra.mxu0 %v437
      %v625 = vpop.f32.mrf.mxu0
      %v626 = vadd.f32 %v368, %v625
      %v627 = vpop.f32.mrf.mxu0
      %v628 = vadd.f32 %v372, %v627
      %629 = vdwg.mxu0
      %v630 = vmax.f32 %v506, 0.0
      %v631 = vmax.f32 %v508, 0.0
      %v632 = vmax.f32 %v512, 0.0
      %v633 = vmax.f32 %v514, 0.0
      %v634 = vmax.f32 %v518, 0.0
      %v635 = vmax.f32 %v520, 0.0
      %v636 = vmax.f32 %v524, 0.0
      %v637 = vmax.f32 %v526, 0.0
      %v638 = vmax.f32 %v530, 0.0
      %v639 = vmax.f32 %v532, 0.0
      %v640 = vmax.f32 %v536, 0.0
      %v641 = vmax.f32 %v538, 0.0
      %v642 = vmax.f32 %v542, 0.0
      %v643 = vmax.f32 %v544, 0.0
      %v644 = vmax.f32 %v548, 0.0
      %v645 = vmax.f32 %v550, 0.0
      %v646 = vmax.f32 %v554, 0.0
      %v647 = vmax.f32 %v556, 0.0
      %v648 = vmax.f32 %v560, 0.0
      %v649 = vmax.f32 %v562, 0.0
      %v650 = vmax.f32 %v566, 0.0
      %v651 = vmax.f32 %v568, 0.0
      %v652 = vmax.f32 %v572, 0.0
      %v653 = vmax.f32 %v574, 0.0
      %v654 = vmax.f32 %v578, 0.0
      %v655 = vmax.f32 %v580, 0.0
      %v656 = vmax.f32 %v584, 0.0
      %v657 = vmax.f32 %v586, 0.0
      %v658 = vmax.f32 %v590, 0.0
      %v659 = vmax.f32 %v592, 0.0
      %v660 = vmax.f32 %v596, 0.0
      %v661 = vmax.f32 %v598, 0.0
      %v662 = vmax.f32 %v602, 0.0
      %v663 = vmax.f32 %v604, 0.0
      %v664 = vmax.f32 %v608, 0.0
      %v665 = vmax.f32 %v610, 0.0
      %v666 = vmax.f32 %v614, 0.0
      %v667 = vmax.f32 %v616, 0.0
      %v668 = vmax.f32 %v620, 0.0
      %v669 = vmax.f32 %v622, 0.0
      %v670 = vmax.f32 %v626, 0.0
      %v671 = vmax.f32 %v628, 0.0
      %v672 = vld [vmem:[%s3] sm:$0xff]
      %v673 = vld [vmem:[%s3 + $0x8] sm:$0xff]
      %v674 = vld [vmem:[%s3 + $0x10] sm:$0xff]
      %v675 = vld [vmem:[%s3 + $0x18] sm:$0xff]
      %v676 = vld [vmem:[%s3 + $0x20] sm:$0xff]
      %v677 = vld [vmem:[%s3 + $0x28] sm:$0xff]
      %v678 = vld [vmem:[%s3 + $0x30] sm:$0xff]
      %v679 = vld [vmem:[%s3 + $0x38] sm:$0xff]
      %v680 = vld [vmem:[%s3 + $0x40] sm:$0xff]
      %v681 = vld [vmem:[%s3 + $0x48] sm:$0xff]
      %v682 = vld [vmem:[%s3 + $0x50] sm:$0xff]
      %v683 = vld [vmem:[%s3 + $0x58] sm:$0xff]
      %v684 = vld [vmem:[%s3 + $0x60] sm:$0xff]
      %v685 = vld [vmem:[%s3 + $0x68] sm:$0xff]
      %v686 = vld [vmem:[%s3 + $0x70] sm:$0xff]
      %v687 = vld [vmem:[%s3 + $0x78] sm:$0xff]
      %v688 = vld [vmem:[%s3 + $0x80] sm:$0xff]
      %v689 = vld [vmem:[%s3 + $0x88] sm:$0xff]
      %v690 = vld [vmem:[%s3 + $0x90] sm:$0xff]
      %v691 = vld [vmem:[%s3 + $0x98] sm:$0xff]
      %v692 = vld [vmem:[%s3 + $0xa0] sm:$0xff]
      %v693 = vld [vmem:[%s3 + $0xa8] sm:$0xff]
      %v694 = vld [vmem:[%s3 + $0xb0] sm:$0xff]
      %v695 = vld [vmem:[%s3 + $0xb8] sm:$0xff]
      %v696 = vld [vmem:[%s3 + $0xc0] sm:$0xff]
      %v697 = vld [vmem:[%s3 + $0xc8] sm:$0xff]
      %v698 = vld [vmem:[%s3 + $0xd0] sm:$0xff]
      %v699 = vld [vmem:[%s3 + $0xd8] sm:$0xff]
      %v700 = vld [vmem:[%s3 + $0xe0] sm:$0xff]
      %v701 = vld [vmem:[%s3 + $0xe8] sm:$0xff]
      %v702 = vld [vmem:[%s3 + $0xf0] sm:$0xff]
      %v703 = vld [vmem:[%s3 + $0xf8] sm:$0xff]
      %v704 = vld [vmem:[%s4] sm:$0x1]
      %v706 = vlaneseq
      %v707 = vshrl.u32 %v706, 7
      %v708 = vsub.s32 0, %v707
      %v709 = vrot.slane %v704, %v708
      %711 = vmatprep.subr.mxu0 0.0
      %712 = vmatpush1.msra.mxu0 %v687
      %713 = vmatprep.subr.mxu0 0.0
      %714 = vmatpush1.msra.mxu0 %v686
      %715 = vmatprep.subr.mxu0 0.0
      %716 = vmatpush1.msra.mxu0 %v685
      %717 = vmatprep.subr.mxu0 0.0
      %718 = vmatpush1.msra.mxu0 %v684
      %719 = vmatprep.subr.mxu0 0.0
      %720 = vmatpush1.msra.mxu0 %v683
      %721 = vmatprep.subr.mxu0 0.0
      %722 = vmatpush1.msra.mxu0 %v682
      %723 = vmatprep.subr.mxu0 0.0
      %724 = vmatpush1.msra.mxu0 %v681
      %725 = vmatprep.subr.mxu0 0.0
      %726 = vmatpush1.msra.mxu0 %v680
      %727 = vmatprep.subr.mxu0 0.0
      %728 = vmatpush1.msra.mxu0 %v679
      %729 = vmatprep.subr.mxu0 0.0
      %730 = vmatpush1.msra.mxu0 %v678
      %731 = vmatprep.subr.mxu0 0.0
      %732 = vmatpush1.msra.mxu0 %v677
      %733 = vmatprep.subr.mxu0 0.0
      %734 = vmatpush1.msra.mxu0 %v676
      %735 = vmatprep.subr.mxu0 0.0
      %736 = vmatpush1.msra.mxu0 %v675
      %737 = vmatprep.subr.mxu0 0.0
      %738 = vmatpush1.msra.mxu0 %v674
      %739 = vmatprep.subr.mxu0 0.0
      %740 = vmatpush1.msra.mxu0 %v673
      %741 = vmatprep.subr.mxu0 0.0
      %742 = vmatpush1.msra.mxu0 %v672
      %743 = vmatprep.subr.mxu0 0.0
      %744 = vmatpush2.msra.mxu0 %v703
      %745 = vmatprep.subr.mxu0 0.0
      %746 = vmatpush2.msra.mxu0 %v702
      %747 = vmatprep.subr.mxu0 0.0
      %748 = vmatpush2.msra.mxu0 %v701
      %749 = vmatprep.subr.mxu0 0.0
      %750 = vmatpush2.msra.mxu0 %v700
      %751 = vmatprep.subr.mxu0 0.0
      %752 = vmatpush2.msra.mxu0 %v699
      %753 = vmatprep.subr.mxu0 0.0
      %754 = vmatpush2.msra.mxu0 %v698
      %755 = vmatprep.subr.mxu0 0.0
      %756 = vmatpush2.msra.mxu0 %v697
      %757 = vmatprep.subr.mxu0 0.0
      %758 = vmatpush2.msra.mxu0 %v696
      %759 = vmatprep.subr.mxu0 0.0
      %760 = vmatpush2.msra.mxu0 %v695
      %761 = vmatprep.subr.mxu0 0.0
      %762 = vmatpush2.msra.mxu0 %v694
      %763 = vmatprep.subr.mxu0 0.0
      %764 = vmatpush2.msra.mxu0 %v693
      %765 = vmatprep.subr.mxu0 0.0
      %766 = vmatpush2.msra.mxu0 %v692
      %767 = vmatprep.subr.mxu0 0.0
      %768 = vmatpush2.msra.mxu0 %v691
      %769 = vmatprep.subr.mxu0 0.0
      %770 = vmatpush2.msra.mxu0 %v690
      %771 = vmatprep.subr.mxu0 0.0
      %772 = vmatpush2.msra.mxu0 %v689
      %773 = vmatprep.subr.mxu0 0.0
      %774 = vmatpush2.msra.mxu0 %v688
      %775 = vmatprep.mubr.f32.mxu0 %v631
      %776 = vmatmul.mubr.f32.gmra.mxu0 %v630
      %v777 = vpop.f32.mrf.mxu0
      %v778 = vadd.f32 %v709, %v777
      %v779 = vpop.f32.mrf.mxu0
      %780 = vmatprep.mubr.f32.mxu0 %v633
      %781 = vmatmul.mubr.f32.gmra.mxu0 %v632
      %v782 = vpop.f32.mrf.mxu0
      %v783 = vadd.f32 %v709, %v782
      %v784 = vpop.f32.mrf.mxu0
      %785 = vmatprep.mubr.f32.mxu0 %v635
      %786 = vmatmul.mubr.f32.gmra.mxu0 %v634
      %v787 = vpop.f32.mrf.mxu0
      %v788 = vadd.f32 %v709, %v787
      %v789 = vpop.f32.mrf.mxu0
      %790 = vmatprep.mubr.f32.mxu0 %v637
      %791 = vmatmul.mubr.f32.gmra.mxu0 %v636
      %v792 = vpop.f32.mrf.mxu0
      %v793 = vadd.f32 %v709, %v792
      %v794 = vpop.f32.mrf.mxu0
      %795 = vmatprep.mubr.f32.mxu0 %v639
      %796 = vmatmul.mubr.f32.gmra.mxu0 %v638
      %v797 = vpop.f32.mrf.mxu0
      %v798 = vadd.f32 %v709, %v797
      %v799 = vpop.f32.mrf.mxu0
      %800 = vmatprep.mubr.f32.mxu0 %v641
      %801 = vmatmul.mubr.f32.gmra.mxu0 %v640
      %v802 = vpop.f32.mrf.mxu0
      %v803 = vadd.f32 %v709, %v802
      %v804 = vpop.f32.mrf.mxu0
      %805 = vmatprep.mubr.f32.mxu0 %v643
      %806 = vmatmul.mubr.f32.gmra.mxu0 %v642
      %v807 = vpop.f32.mrf.mxu0
      %v808 = vadd.f32 %v709, %v807
      %v809 = vpop.f32.mrf.mxu0
      %810 = vmatprep.mubr.f32.mxu0 %v645
      %811 = vmatmul.mubr.f32.gmra.mxu0 %v644
      %v812 = vpop.f32.mrf.mxu0
      %v813 = vadd.f32 %v709, %v812
      %v814 = vpop.f32.mrf.mxu0
      %815 = vmatprep.mubr.f32.mxu0 %v647
      %816 = vmatmul.mubr.f32.gmra.mxu0 %v646
      %v817 = vpop.f32.mrf.mxu0
      %v818 = vadd.f32 %v709, %v817
      %v819 = vpop.f32.mrf.mxu0
      %820 = vmatprep.mubr.f32.mxu0 %v649
      %821 = vmatmul.mubr.f32.gmra.mxu0 %v648
      %v822 = vpop.f32.mrf.mxu0
      %v823 = vadd.f32 %v709, %v822
      %v824 = vpop.f32.mrf.mxu0
      %825 = vmatprep.mubr.f32.mxu0 %v651
      %826 = vmatmul.mubr.f32.gmra.mxu0 %v650
      %v827 = vpop.f32.mrf.mxu0
      %v828 = vadd.f32 %v709, %v827
      %v829 = vpop.f32.mrf.mxu0
      %830 = vmatprep.mubr.f32.mxu0 %v653
      %831 = vmatmul.mubr.f32.gmra.mxu0 %v652
      %v832 = vpop.f32.mrf.mxu0
      %v833 = vadd.f32 %v709, %v832
      %v834 = vpop.f32.mrf.mxu0
      %835 = vmatprep.mubr.f32.mxu0 %v655
      %836 = vmatmul.mubr.f32.gmra.mxu0 %v654
      %v837 = vpop.f32.mrf.mxu0
      %v838 = vadd.f32 %v709, %v837
      %v839 = vpop.f32.mrf.mxu0
      %840 = vmatprep.mubr.f32.mxu0 %v657
      %841 = vmatmul.mubr.f32.gmra.mxu0 %v656
      %v842 = vpop.f32.mrf.mxu0
      %v843 = vadd.f32 %v709, %v842
      %v844 = vpop.f32.mrf.mxu0
      %845 = vmatprep.mubr.f32.mxu0 %v659
      %846 = vmatmul.mubr.f32.gmra.mxu0 %v658
      %v847 = vpop.f32.mrf.mxu0
      %v848 = vadd.f32 %v709, %v847
      %v849 = vpop.f32.mrf.mxu0
      %850 = vmatprep.mubr.f32.mxu0 %v661
      %851 = vmatmul.mubr.f32.gmra.mxu0 %v660
      %v852 = vpop.f32.mrf.mxu0
      %v853 = vadd.f32 %v709, %v852
      %v854 = vpop.f32.mrf.mxu0
      %855 = vmatprep.mubr.f32.mxu0 %v663
      %856 = vmatmul.mubr.f32.gmra.mxu0 %v662
      %v857 = vpop.f32.mrf.mxu0
      %v858 = vadd.f32 %v709, %v857
      %v859 = vpop.f32.mrf.mxu0
      %860 = vmatprep.mubr.f32.mxu0 %v665
      %861 = vmatmul.mubr.f32.gmra.mxu0 %v664
      %v862 = vpop.f32.mrf.mxu0
      %v863 = vadd.f32 %v709, %v862
      %v864 = vpop.f32.mrf.mxu0
      %865 = vmatprep.mubr.f32.mxu0 %v667
      %866 = vmatmul.mubr.f32.gmra.mxu0 %v666
      %v867 = vpop.f32.mrf.mxu0
      %v868 = vadd.f32 %v709, %v867
      %v869 = vpop.f32.mrf.mxu0
      %870 = vmatprep.mubr.f32.mxu0 %v669
      %871 = vmatmul.mubr.f32.gmra.mxu0 %v668
      %v872 = vpop.f32.mrf.mxu0
      %v873 = vadd.f32 %v709, %v872
      %v874 = vpop.f32.mrf.mxu0
      %875 = vmatprep.mubr.f32.mxu0 %v671
      %876 = vmatmul.mubr.f32.gmra.mxu0 %v670
      %v877 = vpop.f32.mrf.mxu0
      %v878 = vadd.f32 %v709, %v877
      %v879 = vpop.f32.mrf.mxu0
      %880 = vdwg.mxu0
      %v881 = vmax.f32 %v778, 0.0
      %v882 = vmax.f32 %v783, 0.0
      %v883 = vmax.f32 %v788, 0.0
      %v884 = vmax.f32 %v793, 0.0
      %v885 = vmax.f32 %v798, 0.0
      %v886 = vmax.f32 %v803, 0.0
      %v887 = vmax.f32 %v808, 0.0
      %v888 = vmax.f32 %v813, 0.0
      %v889 = vmax.f32 %v818, 0.0
      %v890 = vmax.f32 %v823, 0.0
      %v891 = vmax.f32 %v828, 0.0
      %v892 = vmax.f32 %v833, 0.0
      %v893 = vmax.f32 %v838, 0.0
      %v894 = vmax.f32 %v843, 0.0
      %v895 = vmax.f32 %v848, 0.0
      %v896 = vmax.f32 %v853, 0.0
      %v897 = vmax.f32 %v858, 0.0
      %v898 = vmax.f32 %v863, 0.0
      %v899 = vmax.f32 %v868, 0.0
      %v900 = vmax.f32 %v873, 0.0
      %v901 = vmax.f32 %v878, 0.0
      %v902 = vld [vmem:[%s5] sm:$0xff]
      %v903 = vld [vmem:[%s5 + $0x8] sm:$0xff]
      %v904 = vld [vmem:[%s5 + $0x10] sm:$0xff]
      %v905 = vld [vmem:[%s5 + $0x18] sm:$0xff]
      %v906 = vld [vmem:[%s5 + $0x20] sm:$0xff]
      %v907 = vld [vmem:[%s5 + $0x28] sm:$0xff]
      %v908 = vld [vmem:[%s5 + $0x30] sm:$0xff]
      %v909 = vld [vmem:[%s5 + $0x38] sm:$0xff]
      %v910 = vld [vmem:[%s5 + $0x40] sm:$0xff]
      %v911 = vld [vmem:[%s5 + $0x48] sm:$0xff]
      %v912 = vld [vmem:[%s5 + $0x50] sm:$0xff]
      %v913 = vld [vmem:[%s5 + $0x58] sm:$0xff]
      %v914 = vld [vmem:[%s5 + $0x60] sm:$0xff]
      %v915 = vld [vmem:[%s5 + $0x68] sm:$0xff]
      %v916 = vld [vmem:[%s5 + $0x70] sm:$0xff]
      %v917 = vld [vmem:[%s5 + $0x78] sm:$0xff]
      %v918 = vld [vmem:[%s6] sm:$0x1]
      %v920 = vlaneseq
      %v921 = vshrl.u32 %v920, 7
      %v922 = vsub.s32 0, %v921
      %v923 = vrot.slane %v918, %v922
      %925 = vmatprep.subr.mxu0 0.0
      %926 = vmatpush1.msra.mxu0 %v917
      %927 = vmatprep.subr.mxu0 0.0
      %928 = vmatpush1.msra.mxu0 %v916
      %929 = vmatprep.subr.mxu0 0.0
      %930 = vmatpush1.msra.mxu0 %v915
      %931 = vmatprep.subr.mxu0 0.0
      %932 = vmatpush1.msra.mxu0 %v914
      %933 = vmatprep.subr.mxu0 0.0
      %934 = vmatpush1.msra.mxu0 %v913
      %935 = vmatprep.subr.mxu0 0.0
      %936 = vmatpush1.msra.mxu0 %v912
      %937 = vmatprep.subr.mxu0 0.0
      %938 = vmatpush1.msra.mxu0 %v911
      %939 = vmatprep.subr.mxu0 0.0
      %940 = vmatpush1.msra.mxu0 %v910
      %941 = vmatprep.subr.mxu0 0.0
      %942 = vmatpush1.msra.mxu0 %v909
      %943 = vmatprep.subr.mxu0 0.0
      %944 = vmatpush1.msra.mxu0 %v908
      %945 = vmatprep.subr.mxu0 0.0
      %946 = vmatpush1.msra.mxu0 %v907
      %947 = vmatprep.subr.mxu0 0.0
      %948 = vmatpush1.msra.mxu0 %v906
      %949 = vmatprep.subr.mxu0 0.0
      %950 = vmatpush1.msra.mxu0 %v905
      %951 = vmatprep.subr.mxu0 0.0
      %952 = vmatpush1.msra.mxu0 %v904
      %953 = vmatprep.subr.mxu0 0.0
      %954 = vmatpush1.msra.mxu0 %v903
      %955 = vmatprep.subr.mxu0 0.0
      %956 = vmatpush1.msra.mxu0 %v902
      %957 = vmatprep.subr.mxu0 0.0
      %958 = vmatpush2.msra.mxu0 0.0
      %959 = vmatprep.subr.mxu0 0.0
      %960 = vmatpush2.msra.mxu0 0.0
      %961 = vmatprep.subr.mxu0 0.0
      %962 = vmatpush2.msra.mxu0 0.0
      %963 = vmatprep.subr.mxu0 0.0
      %964 = vmatpush2.msra.mxu0 0.0
      %965 = vmatprep.subr.mxu0 0.0
      %966 = vmatpush2.msra.mxu0 0.0
      %967 = vmatprep.subr.mxu0 0.0
      %968 = vmatpush2.msra.mxu0 0.0
      %969 = vmatprep.subr.mxu0 0.0
      %970 = vmatpush2.msra.mxu0 0.0
      %971 = vmatprep.subr.mxu0 0.0
      %972 = vmatpush2.msra.mxu0 0.0
      %973 = vmatprep.subr.mxu0 0.0
      %974 = vmatpush2.msra.mxu0 0.0
      %975 = vmatprep.subr.mxu0 0.0
      %976 = vmatpush2.msra.mxu0 0.0
      %977 = vmatprep.subr.mxu0 0.0
      %978 = vmatpush2.msra.mxu0 0.0
      %979 = vmatprep.subr.mxu0 0.0
      %980 = vmatpush2.msra.mxu0 0.0
      %981 = vmatprep.subr.mxu0 0.0
      %982 = vmatpush2.msra.mxu0 0.0
      %983 = vmatprep.subr.mxu0 0.0
      %984 = vmatpush2.msra.mxu0 0.0
      %985 = vmatprep.subr.mxu0 0.0
      %986 = vmatpush2.msra.mxu0 0.0
      %987 = vmatprep.subr.mxu0 0.0
      %988 = vmatpush2.msra.mxu0 0.0
      %989 = vmatprep.mubr.f32.mxu0 0.0
      %990 = vmatmul.mubr.f32.gmra.mxu0 %v881
      %v991 = vpop.f32.mrf.mxu0
      %v992 = vadd.f32 %v923, %v991
      %v993 = vpop.f32.mrf.mxu0
      %994 = vmatprep.mubr.f32.mxu0 0.0
      %995 = vmatmul.mubr.f32.gmra.mxu0 %v882
      %v996 = vpop.f32.mrf.mxu0
      %v997 = vadd.f32 %v923, %v996
      %v998 = vpop.f32.mrf.mxu0
      %999 = vmatprep.mubr.f32.mxu0 0.0
      %1000 = vmatmul.mubr.f32.gmra.mxu0 %v883
      %v1001 = vpop.f32.mrf.mxu0
      %v1002 = vadd.f32 %v923, %v1001
      %v1003 = vpop.f32.mrf.mxu0
      %1004 = vmatprep.mubr.f32.mxu0 0.0
      %1005 = vmatmul.mubr.f32.gmra.mxu0 %v884
      %v1006 = vpop.f32.mrf.mxu0
      %v1007 = vadd.f32 %v923, %v1006
      %v1008 = vpop.f32.mrf.mxu0
      %1009 = vmatprep.mubr.f32.mxu0 0.0
      %1010 = vmatmul.mubr.f32.gmra.mxu0 %v885
      %v1011 = vpop.f32.mrf.mxu0
      %v1012 = vadd.f32 %v923, %v1011
      %v1013 = vpop.f32.mrf.mxu0
      %1014 = vmatprep.mubr.f32.mxu0 0.0
      %1015 = vmatmul.mubr.f32.gmra.mxu0 %v886
      %v1016 = vpop.f32.mrf.mxu0
      %v1017 = vadd.f32 %v923, %v1016
      %v1018 = vpop.f32.mrf.mxu0
      %1019 = vmatprep.mubr.f32.mxu0 0.0
      %1020 = vmatmul.mubr.f32.gmra.mxu0 %v887
      %v1021 = vpop.f32.mrf.mxu0
      %v1022 = vadd.f32 %v923, %v1021
      %v1023 = vpop.f32.mrf.mxu0
      %1024 = vmatprep.mubr.f32.mxu0 0.0
      %1025 = vmatmul.mubr.f32.gmra.mxu0 %v888
      %v1026 = vpop.f32.mrf.mxu0
      %v1027 = vadd.f32 %v923, %v1026
      %v1028 = vpop.f32.mrf.mxu0
      %1029 = vmatprep.mubr.f32.mxu0 0.0
      %1030 = vmatmul.mubr.f32.gmra.mxu0 %v889
      %v1031 = vpop.f32.mrf.mxu0
      %v1032 = vadd.f32 %v923, %v1031
      %v1033 = vpop.f32.mrf.mxu0
      %1034 = vmatprep.mubr.f32.mxu0 0.0
      %1035 = vmatmul.mubr.f32.gmra.mxu0 %v890
      %v1036 = vpop.f32.mrf.mxu0
      %v1037 = vadd.f32 %v923, %v1036
      %v1038 = vpop.f32.mrf.mxu0
      %1039 = vmatprep.mubr.f32.mxu0 0.0
      %1040 = vmatmul.mubr.f32.gmra.mxu0 %v891
      %v1041 = vpop.f32.mrf.mxu0
      %v1042 = vadd.f32 %v923, %v1041
      %v1043 = vpop.f32.mrf.mxu0
      %1044 = vmatprep.mubr.f32.mxu0 0.0
      %1045 = vmatmul.mubr.f32.gmra.mxu0 %v892
      %v1046 = vpop.f32.mrf.mxu0
      %v1047 = vadd.f32 %v923, %v1046
      %v1048 = vpop.f32.mrf.mxu0
      %1049 = vmatprep.mubr.f32.mxu0 0.0
      %1050 = vmatmul.mubr.f32.gmra.mxu0 %v893
      %v1051 = vpop.f32.mrf.mxu0
      %v1052 = vadd.f32 %v923, %v1051
      %v1053 = vpop.f32.mrf.mxu0
      %1054 = vmatprep.mubr.f32.mxu0 0.0
      %1055 = vmatmul.mubr.f32.gmra.mxu0 %v894
      %v1056 = vpop.f32.mrf.mxu0
      %v1057 = vadd.f32 %v923, %v1056
      %v1058 = vpop.f32.mrf.mxu0
      %1059 = vmatprep.mubr.f32.mxu0 0.0
      %1060 = vmatmul.mubr.f32.gmra.mxu0 %v895
      %v1061 = vpop.f32.mrf.mxu0
      %v1062 = vadd.f32 %v923, %v1061
      %v1063 = vpop.f32.mrf.mxu0
      %1064 = vmatprep.mubr.f32.mxu0 0.0
      %1065 = vmatmul.mubr.f32.gmra.mxu0 %v896
      %v1066 = vpop.f32.mrf.mxu0
      %v1067 = vadd.f32 %v923, %v1066
      %v1068 = vpop.f32.mrf.mxu0
      %1069 = vmatprep.mubr.f32.mxu0 0.0
      %1070 = vmatmul.mubr.f32.gmra.mxu0 %v897
      %v1071 = vpop.f32.mrf.mxu0
      %v1072 = vadd.f32 %v923, %v1071
      %v1073 = vpop.f32.mrf.mxu0
      %1074 = vmatprep.mubr.f32.mxu0 0.0
      %1075 = vmatmul.mubr.f32.gmra.mxu0 %v898
      %v1076 = vpop.f32.mrf.mxu0
      %v1077 = vadd.f32 %v923, %v1076
      %v1078 = vpop.f32.mrf.mxu0
      %1079 = vmatprep.mubr.f32.mxu0 0.0
      %1080 = vmatmul.mubr.f32.gmra.mxu0 %v899
      %v1081 = vpop.f32.mrf.mxu0
      %v1082 = vadd.f32 %v923, %v1081
      %v1083 = vpop.f32.mrf.mxu0
      %1084 = vmatprep.mubr.f32.mxu0 0.0
      %1085 = vmatmul.mubr.f32.gmra.mxu0 %v900
      %v1086 = vpop.f32.mrf.mxu0
      %v1087 = vadd.f32 %v923, %v1086
      %v1088 = vpop.f32.mrf.mxu0
      %1089 = vmatprep.mubr.f32.mxu0 0.0
      %1090 = vmatmul.mubr.f32.gmra.mxu0 %v901
      %v1091 = vpop.f32.mrf.mxu0
      %v1092 = vadd.f32 %v923, %v1091
      %v1093 = vpop.f32.mrf.mxu0
      %1094 = vdwg.mxu0
      %v1095 = vmax.f32 %v992, 0.0
      %v1096 = vmax.f32 %v997, 0.0
      %v1097 = vmax.f32 %v1002, 0.0
      %v1098 = vmax.f32 %v1007, 0.0
      %v1099 = vmax.f32 %v1012, 0.0
      %v1100 = vmax.f32 %v1017, 0.0
      %v1101 = vmax.f32 %v1022, 0.0
      %v1102 = vmax.f32 %v1027, 0.0
      %v1103 = vmax.f32 %v1032, 0.0
      %v1104 = vmax.f32 %v1037, 0.0
      %v1105 = vmax.f32 %v1042, 0.0
      %v1106 = vmax.f32 %v1047, 0.0
      %v1107 = vmax.f32 %v1052, 0.0
      %v1108 = vmax.f32 %v1057, 0.0
      %v1109 = vmax.f32 %v1062, 0.0
      %v1110 = vmax.f32 %v1067, 0.0
      %v1111 = vmax.f32 %v1072, 0.0
      %v1112 = vmax.f32 %v1077, 0.0
      %v1113 = vmax.f32 %v1082, 0.0
      %v1114 = vmax.f32 %v1087, 0.0
      %v1115 = vmax.f32 %v1092, 0.0
      %v1116 = vld [vmem:[%s7] sm:$0x1]
      %v1118 = vlaneseq
      %v1119 = vshrl.u32 %v1118, 7
      %v1120 = vsub.s32 0, %v1119
      %v1121 = vrot.slane %v1116, %v1120
      %v1123 = vmul.f32 %v1095, %v1121
      %v1124 = vmul.f32 %v1096, %v1121
      %v1125 = vmul.f32 %v1097, %v1121
      %v1126 = vmul.f32 %v1098, %v1121
      %v1127 = vmul.f32 %v1099, %v1121
      %v1128 = vmul.f32 %v1100, %v1121
      %v1129 = vmul.f32 %v1101, %v1121
      %v1130 = vmul.f32 %v1102, %v1121
      %v1131 = vmul.f32 %v1103, %v1121
      %v1132 = vmul.f32 %v1104, %v1121
      %v1133 = vmul.f32 %v1105, %v1121
      %v1134 = vmul.f32 %v1106, %v1121
      %v1135 = vmul.f32 %v1107, %v1121
      %v1136 = vmul.f32 %v1108, %v1121
      %v1137 = vmul.f32 %v1109, %v1121
      %v1138 = vmul.f32 %v1110, %v1121
      %v1139 = vmul.f32 %v1111, %v1121
      %v1140 = vmul.f32 %v1112, %v1121
      %v1141 = vmul.f32 %v1113, %v1121
      %v1142 = vmul.f32 %v1114, %v1121
      %v1143 = vmul.f32 %v1115, %v1121
      %vm1144 = vcmask 523264
      %v1145 = vsel %vm1144, %v1123, 0.0
      %1146 = vadd.xlane.f32.xlu0 %v1145
      %v1147 = vpop.xlane.xlu0 %1146
      %v1148 = vsel %vm1144, %v1124, 0.0
      %1149 = vadd.xlane.f32.xlu0 %v1148
      %v1150 = vpop.xlane.xlu0 %1149
      %v1151 = vsel %vm1144, %v1125, 0.0
      %1152 = vadd.xlane.f32.xlu0 %v1151
      %v1153 = vpop.xlane.xlu0 %1152
      %v1154 = vsel %vm1144, %v1126, 0.0
      %1155 = vadd.xlane.f32.xlu0 %v1154
      %v1156 = vpop.xlane.xlu0 %1155
      %v1157 = vsel %vm1144, %v1127, 0.0
      %1158 = vadd.xlane.f32.xlu0 %v1157
      %v1159 = vpop.xlane.xlu0 %1158
      %v1160 = vsel %vm1144, %v1128, 0.0
      %1161 = vadd.xlane.f32.xlu0 %v1160
      %v1162 = vpop.xlane.xlu0 %1161
      %v1163 = vsel %vm1144, %v1129, 0.0
      %1164 = vadd.xlane.f32.xlu0 %v1163
      %v1165 = vpop.xlane.xlu0 %1164
      %v1166 = vsel %vm1144, %v1130, 0.0
      %1167 = vadd.xlane.f32.xlu0 %v1166
      %v1168 = vpop.xlane.xlu0 %1167
      %v1169 = vsel %vm1144, %v1131, 0.0
      %1170 = vadd.xlane.f32.xlu0 %v1169
      %v1171 = vpop.xlane.xlu0 %1170
      %v1172 = vsel %vm1144, %v1132, 0.0
      %1173 = vadd.xlane.f32.xlu0 %v1172
      %v1174 = vpop.xlane.xlu0 %1173
      %v1175 = vsel %vm1144, %v1133, 0.0
      %1176 = vadd.xlane.f32.xlu0 %v1175
      %v1177 = vpop.xlane.xlu0 %1176
      %v1178 = vsel %vm1144, %v1134, 0.0
      %1179 = vadd.xlane.f32.xlu0 %v1178
      %v1180 = vpop.xlane.xlu0 %1179
      %v1181 = vsel %vm1144, %v1135, 0.0
      %1182 = vadd.xlane.f32.xlu0 %v1181
      %v1183 = vpop.xlane.xlu0 %1182
      %v1184 = vsel %vm1144, %v1136, 0.0
      %1185 = vadd.xlane.f32.xlu0 %v1184
      %v1186 = vpop.xlane.xlu0 %1185
      %v1187 = vsel %vm1144, %v1137, 0.0
      %1188 = vadd.xlane.f32.xlu0 %v1187
      %v1189 = vpop.xlane.xlu0 %1188
      %v1190 = vsel %vm1144, %v1138, 0.0
      %1191 = vadd.xlane.f32.xlu0 %v1190
      %v1192 = vpop.xlane.xlu0 %1191
      %v1193 = vsel %vm1144, %v1139, 0.0
      %1194 = vadd.xlane.f32.xlu0 %v1193
      %v1195 = vpop.xlane.xlu0 %1194
      %v1196 = vsel %vm1144, %v1140, 0.0
      %1197 = vadd.xlane.f32.xlu0 %v1196
      %v1198 = vpop.xlane.xlu0 %1197
      %v1199 = vsel %vm1144, %v1141, 0.0
      %1200 = vadd.xlane.f32.xlu0 %v1199
      %v1201 = vpop.xlane.xlu0 %1200
      %v1202 = vsel %vm1144, %v1142, 0.0
      %1203 = vadd.xlane.f32.xlu0 %v1202
      %v1204 = vpop.xlane.xlu0 %1203
      %v1205 = vsel %vm1144, %v1143, 0.0
      %1206 = vadd.xlane.f32.xlu0 %v1205
      %v1207 = vpop.xlane.xlu0 %1206
      %v1208 = vld [vmem:[#allocation2] sm:$0x1]
      %v1210 = vlaneseq
      %v1211 = vshrl.u32 %v1210, 7
      %v1212 = vsub.s32 0, %v1211
      %v1213 = vrot.slane %v1208, %v1212
      %v1215 = vadd.f32 %v1147, %v1213
      %v1216 = vadd.f32 %v1150, %v1213
      %v1217 = vadd.f32 %v1153, %v1213
      %v1218 = vadd.f32 %v1156, %v1213
      %v1219 = vadd.f32 %v1159, %v1213
      %v1220 = vadd.f32 %v1162, %v1213
      %v1221 = vadd.f32 %v1165, %v1213
      %v1222 = vadd.f32 %v1168, %v1213
      %v1223 = vadd.f32 %v1171, %v1213
      %v1224 = vadd.f32 %v1174, %v1213
      %v1225 = vadd.f32 %v1177, %v1213
      %v1226 = vadd.f32 %v1180, %v1213
      %v1227 = vadd.f32 %v1183, %v1213
      %v1228 = vadd.f32 %v1186, %v1213
      %v1229 = vadd.f32 %v1189, %v1213
      %v1230 = vadd.f32 %v1192, %v1213
      %v1231 = vadd.f32 %v1195, %v1213
      %v1232 = vadd.f32 %v1198, %v1213
      %v1233 = vadd.f32 %v1201, %v1213
      %v1234 = vadd.f32 %v1204, %v1213
      %v1235 = vadd.f32 %v1207, %v1213
      %vm1236 = vcmask 7168
      %1237 = vst.msk [vmem:[%s336] sm:$0xff] %vm1236, %v1215
      %1238 = vst.msk [vmem:[%s336 + $0x8] sm:$0xff] %vm1236, %v1216
      %1239 = vst.msk [vmem:[%s336 + $0x10] sm:$0xff] %vm1236, %v1217
      %1240 = vst.msk [vmem:[%s336 + $0x18] sm:$0xff] %vm1236, %v1218
      %1241 = vst.msk [vmem:[%s336 + $0x20] sm:$0xff] %vm1236, %v1219
      %1242 = vst.msk [vmem:[%s336 + $0x28] sm:$0xff] %vm1236, %v1220
      %1243 = vst.msk [vmem:[%s336 + $0x30] sm:$0xff] %vm1236, %v1221
      %1244 = vst.msk [vmem:[%s336 + $0x38] sm:$0xff] %vm1236, %v1222
      %1245 = vst.msk [vmem:[%s336 + $0x40] sm:$0xff] %vm1236, %v1223
      %1246 = vst.msk [vmem:[%s336 + $0x48] sm:$0xff] %vm1236, %v1224
      %1247 = vst.msk [vmem:[%s336 + $0x50] sm:$0xff] %vm1236, %v1225
      %1248 = vst.msk [vmem:[%s336 + $0x58] sm:$0xff] %vm1236, %v1226
      %1249 = vst.msk [vmem:[%s336 + $0x60] sm:$0xff] %vm1236, %v1227
      %1250 = vst.msk [vmem:[%s336 + $0x68] sm:$0xff] %vm1236, %v1228
      %1251 = vst.msk [vmem:[%s336 + $0x70] sm:$0xff] %vm1236, %v1229
      %1252 = vst.msk [vmem:[%s336 + $0x78] sm:$0xff] %vm1236, %v1230
      %1253 = vst.msk [vmem:[%s336 + $0x80] sm:$0xff] %vm1236, %v1231
      %1254 = vst.msk [vmem:[%s336 + $0x88] sm:$0xff] %vm1236, %v1232
      %1255 = vst.msk [vmem:[%s336 + $0x90] sm:$0xff] %vm1236, %v1233
      %1256 = vst.msk [vmem:[%s336 + $0x98] sm:$0xff] %vm1236, %v1234
      %1257 = vst.msk [vmem:[%s336 + $0xa0] sm:$0xff] %vm1236, %v1235
      %s1258 = smul.u32 21, %s22
      %p1259 = scmp.lt.s32.totalorder %s1258, 41
      %s1260 = scalar_select %p1259, %s1258, 41
      %s1261 = smul.addr %s1260, 8
      %s1262 = scalar_lea.vmem %s9, %s1261
      // Predicated region
      $region57: #{option_pricer_forward.1} parent=55 // pred_check
        %p1263 = pneg %p234
      $region58: #{option_pricer_forward.1} parent=55 // pred_check_branch
        %1265 = sbr.rel (%p1263) target = $region60
      $region59: #{option_pricer_forward.1} parent=55 // pred_region
        %s1266 = smul.u32 21, %s22
      $region60: #{option_pricer_forward.1} parent=55 // pred_fallthru
        _
    $region56: #{option_pricer_forward.1} parent=5 // pred_fallthru
      _
    %p1267 = scmp.le.s32.totalorder 2, %s17
    // Predicated region
    $region61: #{option_pricer_forward.1} parent=5 // pred_check
      %p1268 = pneg %p1267
    $region62: #{option_pricer_forward.1} parent=5 // pred_check_branch
      %1270 = sbr.rel (%p1268) target = $region64
    $region63: #{option_pricer_forward.1} parent=5 // pred_region
      %s1271 = ssub.s32 %s17, 2
      // Predicated region
      $region65: #{option_pricer_forward.1} parent=63 // pred_check
        %p1272 = pneg %p240
      $region66: #{option_pricer_forward.1} parent=63 // pred_check_branch
        %1274 = sbr.rel (%p1272) target = $region68
      $region67: #{option_pricer_forward.1} parent=63 // pred_region
        %s1275 = smul.u32 21, %s23
        %p1276 = scmp.lt.s32.totalorder %s1275, 41
        %s1277 = scalar_select %p1276, %s1275, 41
        %s1278 = smul.addr %s1277, 8
        %s1279 = scalar_lea.vmem %s9, %s1278
      $region68: #{option_pricer_forward.1} parent=63 // pred_fallthru
        _
    $region64: #{option_pricer_forward.1} parent=5 // pred_fallthru
      _
  $region6: #{option_pricer_forward.1} parent=0 // loop_footer
    %s21 = sadd.s32 1, %s17
  $region7: #{option_pricer_forward.1} parent=0 // loop_footer_branch
    %16 = sbr.rel target = $region3
  $region8: #{option_pricer_forward.1} parent=0 // loop_exit
    _

</llo_original>
